<compile_context>
chip_gen: v7x
topology: tpu7x:2x2x1
jax: 0.10.0
libtpu: 0.0.40
codegen_flags: <defaults>
</compile_context>

<pallas_src>
import jax
import jax.numpy as jnp
import numpy as np
from jax.experimental import pallas as pl
from jax.experimental.pallas import tpu as pltpu


def _round_up(x, m):
    return (x + m - 1) // m * m


# ---------------------------------------------------------------------------
# SE(3) channel bookkeeping: Rs = [(multiplicity, l), ...] -> channels = sum m*(2l+1)
# ---------------------------------------------------------------------------
def rs_dim(Rs):
    return sum(m * (2 * l + 1) for m, l in Rs)


def make_se3_transpose_weight(key, Rs_in, Rs_out, size):
    """Deterministically synthesize SE3Kernel(Rs_out, Rs_in, size)().

    For conv_transpose3d the weight shape is (C_in, C_out, k, k, k).
    # TODO(synk): the full SE3 equivariant basis (spherical harmonics x
    # Clebsch-Gordan x gaussian radial window) is parameter setup; here we
    # synthesize a deterministic weight of the correct shape with a gaussian
    # radial envelope instead of the full basis expansion.
    """
    c_in, c_out, k = rs_dim(Rs_in), rs_dim(Rs_out), size
    w = jax.random.normal(key, (c_in, c_out, k, k, k), jnp.float32)
    r = jnp.arange(k, dtype=jnp.float32) - (k - 1) / 2.0
    zz, yy, xx = jnp.meshgrid(r, r, r, indexing="ij")
    radial = jnp.exp(-(zz ** 2 + yy ** 2 + xx ** 2) / (2.0 * (0.6 * k / 2.0) ** 2))
    return (w * radial[None, None]) / np.sqrt(c_in * k ** 3)


# ---------------------------------------------------------------------------
# Pallas transposed 3-D convolution (stride=1, padding=0)
# ---------------------------------------------------------------------------
def conv_transpose3d_pallas(x, weight, compute_dtype=jnp.bfloat16):
    N, Ci, D, H, W = x.shape
    Ci2, Co, k, k2, k3 = weight.shape
    assert Ci == Ci2 and k == k2 == k3
    p = k - 1
    Do, Ho, Wo = D + p, H + p, W + p
    Dp, Hp, Wp = D + 2 * p, H + 2 * p, W + 2 * p

    Lout = Ho * Wp                         # flat (oh, ow) output extent (stride Wp)
    F = _round_up(Hp * Wp + k - 1, 128)    # lane-dense flattened padded plane
    KK = k * k * Ci                        # fused contraction dim: (b, c, ci)

    # ---- wrapper-side re-layout (pure plumbing, done once by XLA) ------------
    # zero-pad spatially by k-1 on every side; flatten (Hp, Wp) onto lanes.
    x_pad = jnp.pad(x, ((0, 0), (0, 0), (p, p), (p, p), (p, p)))   # (N,Ci,Dp,Hp,Wp)
    xf = jnp.transpose(x_pad, (0, 2, 1, 3, 4)).reshape(N, Dp, Ci, Hp * Wp)
    xf = jnp.pad(xf, ((0, 0), (0, 0), (0, 0), (0, F - Hp * Wp)))
    xf = xf.astype(compute_dtype)                                  # (N, Dp, Ci, F)

    # flip taps, swap in/out channels, fuse (b, c, ci) into one lane-dense slab:
    # w_conv[a, b, c, co, ci] = weight[ci, co, k-1-a, k-1-b, k-1-c]
    w_conv = jnp.transpose(weight[:, :, ::-1, ::-1, ::-1], (2, 3, 4, 1, 0))
    w2 = jnp.transpose(w_conv, (0, 3, 1, 2, 4)).reshape(k, Co, KK)
    w2 = w2.astype(compute_dtype)                                  # (k, Co, KK)

    def kernel(x_ref, w_ref, o_ref):
        a = pl.program_id(2)

        @pl.when(a == 0)
        def _init():
            o_ref[...] = jnp.zeros_like(o_ref)

        xp = x_ref[0, 0]                                           # (Ci, F)
        # one flat lane shift per (b, c) tap, stacked into the fused contraction
        rows = [xp[:, b * Wp + c: b * Wp + c + Lout]
                for b in range(k) for c in range(k)]               # k*k x (Ci, Lout)
        rhs = jnp.concatenate(rows, axis=0)                        # (KK, Lout)
        contrib = jnp.dot(w_ref[0], rhs,
                          preferred_element_type=jnp.float32)      # (Co, Lout) f32
        o_ref[0, 0, :, :] += contrib

    itemsize = jnp.dtype(compute_dtype).itemsize
    flops = 2 * N * Do * k * Co * KK * Lout
    bytes_accessed = (N * Do * k * Ci * F * itemsize
                      + k * Co * KK * itemsize
                      + N * Do * Co * Lout * 4)

    out_flat = pl.pallas_call(
        kernel,
        out_shape=jax.ShapeDtypeStruct((N, Do, Co, Lout), jnp.float32),
        grid_spec=pltpu.PrefetchScalarGridSpec(
            num_scalar_prefetch=0,
            grid=(N, Do, k),
            in_specs=[
                # one padded D-plane; block size 1 on Dp => block index == element
                # index od + a, so no overlapping-window block is ever resident.
                pl.BlockSpec((1, 1, Ci, F), lambda n, od, a: (n, od + a, 0, 0)),
                # per-D-tap fused weight slab (Co, k*k*Ci)
                pl.BlockSpec((1, Co, KK), lambda n, od, a: (a, 0, 0)),
            ],
            out_specs=pl.BlockSpec((1, 1, Co, Lout),
                                   lambda n, od, a: (n, od, 0, 0)),
        ),
        compiler_params=pltpu.CompilerParams(
            dimension_semantics=("parallel", "parallel", "arbitrary")),
        cost_estimate=pl.CostEstimate(flops=flops, transcendentals=0,
                                      bytes_accessed=bytes_accessed),
    )(xf, w2)

    # undo the flat layout: f = oh*Wp + ow -> (oh, ow); drop the Wp-Wo garbage lanes
    out = out_flat.reshape(N, Do, Co, Ho, Wp)[..., :Wo]            # (N,Do,Co,Ho,Wo)
    return jnp.transpose(out, (0, 2, 1, 3, 4))                     # NCDHW


# ---------------------------------------------------------------------------
# Independent reference: literal scatter-add definition of conv_transpose3d
# ---------------------------------------------------------------------------
def conv_transpose3d_reference(x, weight):
    N, Ci, D, H, W = x.shape
    _, Co, k, _, _ = weight.shape
    out = jnp.zeros((N, Co, D + k - 1, H + k - 1, W + k - 1), jnp.float32)
    for a in range(k):
        for b in range(k):
            for c in range(k):
                contrib = jnp.einsum('nizyx,io->nozyx', x, weight[:, :, a, b, c])
                out = out.at[:, :, a:a + D, b:b + H, c:c + W].add(contrib)
    return out


if __name__ == "__main__":
    # SE(3) representation lists: Rs = [(multiplicity, l), ...]
    Rs_in = [(8, 0), (1, 1), (1, 2)]     # C_in  = 8 + 3 + 5 = 16
    Rs_out = [(8, 0), (1, 1), (1, 2)]    # C_out = 8 + 3 + 5 = 16
    size = 3
    N, D, H, W = 2, 16, 16, 16

    key = jax.random.PRNGKey(0)
    kx, kw = jax.random.split(key)
    x = jax.random.normal(kx, (N, rs_dim(Rs_in), D, H, W), jnp.float32)
    weight = make_se3_transpose_weight(kw, Rs_in, Rs_out, size)

    out = jax.jit(conv_transpose3d_pallas)(x, weight)
    out = jax.block_until_ready(out)

    # Reference on bf16-rounded operands (the kernel computes the dot in bf16 with
    # f32 accumulation per the v6e/v7x MXU recommendation); both paths then see the
    # exact same operand values, so the comparison checks accumulation only.
    x_q = x.astype(jnp.bfloat16).astype(jnp.float32)
    w_q = weight.astype(jnp.bfloat16).astype(jnp.float32)
    ref = conv_transpose3d_reference(x_q, w_q)

    expected_shape = (N, rs_dim(Rs_out), D + size - 1, H + size - 1, W + size - 1)
    assert out.shape == ref.shape == expected_shape
    err = float(jnp.max(jnp.abs(out - ref)))
    if err < 1e-4:
        print("KERNEL_OK")
    else:
        raise SystemExit(f"mismatch: max abs err {err}")
</pallas_src>

<mosaic_0001>
module attributes {stable_mosaic.version = 11 : i64} {
  func.func @kernel(%arg0: i32, %arg1: i32, %arg2: i32, %arg3: memref<1x1x16x512xbf16, #tpu.memory_space<vmem>>, %arg4: memref<1x16x144xbf16, #tpu.memory_space<vmem>>, %arg5: memref<1x1x16x360xf32, #tpu.memory_space<vmem>>) attributes {dimension_semantics = [#tpu.dimension_semantics<parallel>, #tpu.dimension_semantics<parallel>, #tpu.dimension_semantics<arbitrary>], iteration_bounds = array<i64: 2, 18, 3>, scalar_prefetch = 0 : i64, scratch_operands = 0 : i64, tpu.core_type = #tpu.core_type<tc>, window_params = [{transform_indices = @transform_0, window_bounds = array<i64: 1, 1, 16, 512>}, {transform_indices = @transform_1, window_bounds = array<i64: 1, 16, 144>}, {transform_indices = @transform_2, window_bounds = array<i64: 1, 1, 16, 360>}]} {
    %c0_i32 = arith.constant 0 : i32
    %0 = arith.cmpi eq, %arg2, %c0_i32 : i32
    %1 = arith.extui %0 : i1 to i32
    %c0_i32_0 = arith.constant 0 : i32
    %2 = arith.cmpi ne, %1, %c0_i32_0 : i32
    scf.if %2 {
      %cst_15 = arith.constant 0.000000e+00 : f32
      %24 = vector.broadcast %cst_15 : f32 to vector<1x1x16x360xf32>
      %c0_16 = arith.constant 0 : index
      %c0_17 = arith.constant 0 : index
      %c0_18 = arith.constant 0 : index
      %c0_19 = arith.constant 0 : index
      %25 = vector.load %arg5[%c0_16, %c0_17, %c0_18, %c0_19] : memref<1x1x16x360xf32, #tpu.memory_space<vmem>>, vector<1x1x16x360xf32>
      tpu.vector_store %arg5[%c0_16, %c0_17, %c0_18, %c0_19], %24 {strides = array<i32>} : memref<1x1x16x360xf32, #tpu.memory_space<vmem>>, vector<1x1x16x360xf32>,
    } else {
    }
    %c0 = arith.constant 0 : index
    %c0_1 = arith.constant 0 : index
    %c0_2 = arith.constant 0 : index
    %c0_3 = arith.constant 0 : index
    %3 = vector.load %arg3[%c0, %c0_1, %c0_2, %c0_3] : memref<1x1x16x512xbf16, #tpu.memory_space<vmem>>, vector<1x1x16x512xbf16>
    %4 = vector.shape_cast %3 : vector<1x1x16x512xbf16> to vector<16x512xbf16>
    %5 = vector.extract_strided_slice %4 {offsets = [0, 0], sizes = [16, 360], strides = [1, 1]} : vector<16x512xbf16> to vector<16x360xbf16>
    %6 = vector.extract_strided_slice %4 {offsets = [0, 1], sizes = [16, 360], strides = [1, 1]} : vector<16x512xbf16> to vector<16x360xbf16>
    %7 = vector.extract_strided_slice %4 {offsets = [0, 2], sizes = [16, 360], strides = [1, 1]} : vector<16x512xbf16> to vector<16x360xbf16>
    %8 = vector.extract_strided_slice %4 {offsets = [0, 20], sizes = [16, 360], strides = [1, 1]} : vector<16x512xbf16> to vector<16x360xbf16>
    %9 = vector.extract_strided_slice %4 {offsets = [0, 21], sizes = [16, 360], strides = [1, 1]} : vector<16x512xbf16> to vector<16x360xbf16>
    %10 = vector.extract_strided_slice %4 {offsets = [0, 22], sizes = [16, 360], strides = [1, 1]} : vector<16x512xbf16> to vector<16x360xbf16>
    %11 = vector.extract_strided_slice %4 {offsets = [0, 40], sizes = [16, 360], strides = [1, 1]} : vector<16x512xbf16> to vector<16x360xbf16>
    %12 = vector.extract_strided_slice %4 {offsets = [0, 41], sizes = [16, 360], strides = [1, 1]} : vector<16x512xbf16> to vector<16x360xbf16>
    %13 = vector.extract_strided_slice %4 {offsets = [0, 42], sizes = [16, 360], strides = [1, 1]} : vector<16x512xbf16> to vector<16x360xbf16>
    %14 = tpu.concatenate %5, %6, %7, %8, %9, %10, %11, %12, %13 in 0 : vector<16x360xbf16>, vector<16x360xbf16>, vector<16x360xbf16>, vector<16x360xbf16>, vector<16x360xbf16>, vector<16x360xbf16>, vector<16x360xbf16>, vector<16x360xbf16>, vector<16x360xbf16> -> vector<144x360xbf16>
    %c0_4 = arith.constant 0 : index
    %c0_5 = arith.constant 0 : index
    %c0_6 = arith.constant 0 : index
    %15 = vector.load %arg4[%c0_4, %c0_5, %c0_6] : memref<1x16x144xbf16, #tpu.memory_space<vmem>>, vector<1x16x144xbf16>
    %16 = vector.shape_cast %15 : vector<1x16x144xbf16> to vector<16x144xbf16>
    %cst = arith.constant dense<0.000000e+00> : vector<16x360xf32>
    %17 = tpu.matmul %16, %14, %cst {dimension_numbers = #tpu.dot_dimension_numbers<[1], [0], [0], [1], [0, 0, 1, 1], [], []>} : vector<16x144xbf16>, vector<144x360xbf16>, vector<16x360xf32> -> vector<16x360xf32>
    %c0_7 = arith.constant 0 : index
    %c0_8 = arith.constant 0 : index
    %c0_9 = arith.constant 0 : index
    %c0_10 = arith.constant 0 : index
    %18 = vector.load %arg5[%c0_7, %c0_8, %c0_9, %c0_10] : memref<1x1x16x360xf32, #tpu.memory_space<vmem>>, vector<1x1x16x360xf32>
    %19 = vector.shape_cast %18 : vector<1x1x16x360xf32> to vector<16x360xf32>
    %20 = arith.addf %19, %17 : vector<16x360xf32>
    %c0_11 = arith.constant 0 : index
    %c0_12 = arith.constant 0 : index
    %c0_13 = arith.constant 0 : index
    %c0_14 = arith.constant 0 : index
    %21 = vector.load %arg5[%c0_11, %c0_12, %c0_13, %c0_14] : memref<1x1x16x360xf32, #tpu.memory_space<vmem>>, vector<1x1x16x360xf32>
    %22 = vector.shape_cast %21 : vector<1x1x16x360xf32> to vector<16x360xf32>
    %23 = vector.shape_cast %20 : vector<16x360xf32> to vector<1x1x16x360xf32>
    tpu.vector_store %arg5[%c0_11, %c0_12, %c0_13, %c0_14], %23 {strides = array<i32>} : memref<1x1x16x360xf32, #tpu.memory_space<vmem>>, vector<1x1x16x360xf32>,
    return
  }
  func.func @transform_0(%arg0: i32, %arg1: i32, %arg2: i32) -> (i32, i32, i32, i32) {
    %0 = arith.addi %arg1, %arg2 : i32
    %c0_i32 = arith.constant 0 : i32
    %c0_i32_0 = arith.constant 0 : i32
    %c0_i32_1 = arith.constant 0 : i32
    return %arg0, %0, %c0_i32, %c0_i32_0 : i32, i32, i32, i32
  }
  func.func @transform_1(%arg0: i32, %arg1: i32, %arg2: i32) -> (i32, i32, i32) {
    %c0_i32 = arith.constant 0 : i32
    %c0_i32_0 = arith.constant 0 : i32
    %c0_i32_1 = arith.constant 0 : i32
    return %arg2, %c0_i32, %c0_i32_0 : i32, i32, i32
  }
  func.func @transform_2(%arg0: i32, %arg1: i32, %arg2: i32) -> (i32, i32, i32, i32) {
    %c0_i32 = arith.constant 0 : i32
    %c0_i32_0 = arith.constant 0 : i32
    %c0_i32_1 = arith.constant 0 : i32
    return %arg0, %arg1, %c0_i32, %c0_i32_0 : i32, i32, i32, i32
  }
}

</mosaic_0001>

<llo_original>
// kernel: conv_transpose3d_pallas.1
$region0: #{conv_transpose3d_pallas.1}
  #allocation0 [shape = 'u32[]', space=smem, size = 0x4, offset = 0x4, fixed_abs, tag = 'smem constant byte address 0x4 - core index']
  #allocation1 [shape = 'u32[144,128]{1,0:T(1,128)}', space=vmem, size = 0x12000, scoped, tag = 'internal scratch']
  %s0 = inlined_call_operand.vmem [shape: bf16[2,20,16,512], index: 0, kind: input, shape index: {}]
  %s1 = inlined_call_operand.vmem [shape: bf16[3,16,144], index: 1, kind: input, shape index: {}]
  %s2 = inlined_call_operand.vmem [shape: f32[2,18,16,360], index: 2, kind: output, shape index: {}]
  %s3 = sld [smem:[#allocation0]]
  $region45: #{conv_transpose3d_pallas.1} parent=0
    _
  %s5 = ssub.s32 1, %s3
  %s6 = scalar_select 0, %s5, %s3
  loop: start=0, step=1, limit=110
  $region2: #{conv_transpose3d_pallas.1} parent=0 // loop_pre_header
    _
  $region3: #{conv_transpose3d_pallas.1} parent=0 // loop_header
    %s8 = sphi 0, %s12
    %p9 = scmp.ge.s32.totalorder %s8, 110
    %s15 = sphi 0, %s34
    %s16 = sphi 0, %s30
    %s17 = sphi 0, %s26
    %s18 = sphi 0, %s15
    %s19 = sphi 0, %s16
    %s20 = sphi 0, %s17
    %s21 = sphi 0, %s18
    %s22 = sphi 0, %s19
    %s23 = sphi 0, %s20
    %s41 = sphi 0, %s43
    %s44 = sphi 0, %s41
    %s45 = sphi 0, %s44
    %s61 = sphi 0, %s45
    %s67 = sphi 0, %s69
    %s70 = sphi 0, %s67
    %s71 = sphi 0, %s70
    %s87 = sphi 0, %s71
    %s95 = sphi 0, %s97
    %s98 = sphi 0, %s95
    %s99 = sphi 0, %s98
    %s115 = sphi 0, %s99
  $region4: #{conv_transpose3d_pallas.1} parent=0 // loop_header_branch
    %11 = sbr.rel (%p9) target = $region8
  $region5: #{conv_transpose3d_pallas.1} parent=0 // loop_body
    %s13 = ssub.s32 %s8, 1
    %s14 = ssub.s32 %s8, 2
    %s24 = sadd.s32 1, %s17
    %p25 = scmp.ge.s32.totalorder %s24, 3
    %s26 = scalar_select %p25, 0, %s24
    %s27 = sadd.s32 1, %s16
    %s28 = scalar_select %p25, %s27, %s16
    %p29 = scmp.ge.s32.totalorder %s28, 18
    %s30 = scalar_select %p29, 0, %s28
    %s31 = sadd.s32 1, %s15
    %s32 = scalar_select %p29, %s31, %s15
    %p33 = scmp.ge.s32.totalorder %s32, 2
    %s34 = scalar_select %p33, 0, %s32
    %s35 = sadd.s32 %s16, %s17
    %s36 = sadd.s32 %s30, %s26
    %s37 = ssub.s32 %s15, %s34
    %s38 = ssub.s32 %s35, %s36
    %s39 = sor.u32 %s37, %s38
    %p40 = scmp.eq.s32.totalorder %s39, 0
    %s42 = sadd.s32 %s41, 1
    %s43 = scalar_select %p40, %s41, %s42
    %p46 = pneg %p40
    %p47 = scmp.eq.s32.totalorder %s8, 107
    %p48 = por %p46, %p47
    %p49 = scmp.ne.s32.totalorder %s41, %s44
    %p50 = scmp.eq.s32.totalorder %s8, 0
    %p51 = por %p49, %p50
    %p52 = scmp.ne.s32.totalorder %s41, %s44
    %p53 = scmp.eq.s32.totalorder %s13, 107
    %p54 = por %p52, %p53
    %p55 = scmp.ne.s32.totalorder %s44, %s45
    %p56 = scmp.eq.s32.totalorder %s13, 0
    %p57 = por %p55, %p56
    %p58 = scmp.ne.s32.totalorder %s44, %s45
    %p59 = scmp.eq.s32.totalorder %s14, 107
    %p60 = por %p58, %p59
    %p62 = scmp.ne.s32.totalorder %s45, %s61
    %p63 = scmp.eq.s32.totalorder %s14, 0
    %p64 = por %p62, %p63
    %s65 = ssub.s32 %s17, %s26
    %p66 = scmp.eq.s32.totalorder %s65, 0
    %s68 = sadd.s32 %s67, 1
    %s69 = scalar_select %p66, %s67, %s68
    %p72 = pneg %p66
    %p73 = scmp.eq.s32.totalorder %s8, 107
    %p74 = por %p72, %p73
    %p75 = scmp.ne.s32.totalorder %s67, %s70
    %p76 = scmp.eq.s32.totalorder %s8, 0
    %p77 = por %p75, %p76
    %p78 = scmp.ne.s32.totalorder %s67, %s70
    %p79 = scmp.eq.s32.totalorder %s13, 107
    %p80 = por %p78, %p79
    %p81 = scmp.ne.s32.totalorder %s70, %s71
    %p82 = scmp.eq.s32.totalorder %s13, 0
    %p83 = por %p81, %p82
    %p84 = scmp.ne.s32.totalorder %s70, %s71
    %p85 = scmp.eq.s32.totalorder %s14, 107
    %p86 = por %p84, %p85
    %p88 = scmp.ne.s32.totalorder %s71, %s87
    %p89 = scmp.eq.s32.totalorder %s14, 0
    %p90 = por %p88, %p89
    %s91 = ssub.s32 %s15, %s34
    %s92 = ssub.s32 %s16, %s30
    %s93 = sor.u32 %s91, %s92
    %p94 = scmp.eq.s32.totalorder %s93, 0
    %s96 = sadd.s32 %s95, 1
    %s97 = scalar_select %p94, %s95, %s96
    %p100 = pneg %p94
    %p101 = scmp.eq.s32.totalorder %s8, 107
    %p102 = por %p100, %p101
    %p103 = scmp.ne.s32.totalorder %s95, %s98
    %p104 = scmp.eq.s32.totalorder %s8, 0
    %p105 = por %p103, %p104
    %p106 = scmp.ne.s32.totalorder %s95, %s98
    %p107 = scmp.eq.s32.totalorder %s13, 107
    %p108 = por %p106, %p107
    %p109 = scmp.ne.s32.totalorder %s98, %s99
    %p110 = scmp.eq.s32.totalorder %s13, 0
    %p111 = por %p109, %p110
    %p112 = scmp.ne.s32.totalorder %s98, %s99
    %p113 = scmp.eq.s32.totalorder %s14, 107
    %p114 = por %p112, %p113
    %p116 = scmp.ne.s32.totalorder %s99, %s115
    %p117 = scmp.eq.s32.totalorder %s14, 0
    %p118 = por %p116, %p117
    %p119 = scmp.le.s32.totalorder 1, %s8
    %p120 = scmp.lt.s32.totalorder %s8, 109
    %p121 = pnand %p119, %p120
    %p122 = pneg %p121
    // Predicated region
    $region9: #{conv_transpose3d_pallas.1} parent=5 // pred_check
      _
    $region10: #{conv_transpose3d_pallas.1} parent=5 // pred_check_branch
      %124 = sbr.rel (%p121) target = $region12
    $region11: #{conv_transpose3d_pallas.1} parent=5 // pred_region
      %s125 = ssub.s32 %s8, 1
    $region12: #{conv_transpose3d_pallas.1} parent=5 // pred_fallthru
      _
    %p126 = scmp.lt.s32.totalorder %s8, 108
    // Predicated region
    $region13: #{conv_transpose3d_pallas.1} parent=5 // pred_check
      %p127 = pneg %p126
    $region14: #{conv_transpose3d_pallas.1} parent=5 // pred_check_branch
      %129 = sbr.rel (%p127) target = $region16
    $region15: #{conv_transpose3d_pallas.1} parent=5 // pred_region
      // Predicated region
      $region17: #{conv_transpose3d_pallas.1} parent=15 // pred_check
        %p130 = pneg %p51
      $region18: #{conv_transpose3d_pallas.1} parent=15 // pred_check_branch
        %132 = sbr.rel (%p130) target = $region20
      $region19: #{conv_transpose3d_pallas.1} parent=15 // pred_region
        %s133 = sadd.s32 %s16, %s17
        %p134 = scmp.lt.s32.totalorder %s15, 1
        %s135 = scalar_select %p134, %s15, 1
        %p136 = scmp.lt.s32.totalorder %s133, 19
        %s137 = scalar_select %p136, %s133, 19
        %s138 = smul.addr %s137, 8
        %s139 = smul.addr %s135, 160
        %s140 = sadd.s32 %s138, %s139
        %s141 = smul.addr %s140, 4
        %s142 = scalar_lea.vmem %s0, %s141
        %s143 = sadd.s32 %s16, %s17
      $region20: #{conv_transpose3d_pallas.1} parent=15 // pred_fallthru
        _
      // Predicated region
      $region21: #{conv_transpose3d_pallas.1} parent=15 // pred_check
        %p144 = pneg %p77
      $region22: #{conv_transpose3d_pallas.1} parent=15 // pred_check_branch
        %146 = sbr.rel (%p144) target = $region24
      $region23: #{conv_transpose3d_pallas.1} parent=15 // pred_region
        %p147 = scmp.lt.s32.totalorder %s17, 2
        %s148 = scalar_select %p147, %s17, 2
        %s149 = smul.addr %s148, 4
        %s150 = smul.addr %s149, 4
        %s151 = scalar_lea.vmem %s1, %s150
      $region24: #{conv_transpose3d_pallas.1} parent=15 // pred_fallthru
        _
    $region16: #{conv_transpose3d_pallas.1} parent=5 // pred_fallthru
      _
    %p152 = scmp.le.s32.totalorder 1, %s8
    %p153 = scmp.lt.s32.totalorder %s8, 109
    %p154 = pnand %p152, %p153
    %p155 = pneg %p154
    // Predicated region
    $region25: #{conv_transpose3d_pallas.1} parent=5 // pred_check
      _
    $region26: #{conv_transpose3d_pallas.1} parent=5 // pred_check_branch
      %157 = sbr.rel (%p154) target = $region28
    $region27: #{conv_transpose3d_pallas.1} parent=5 // pred_region
      %s158 = ssub.s32 %s8, 1
      %s159 = sadd.s32 %s19, %s20
      %p160 = scmp.lt.s32.totalorder %s18, 1
      %s161 = scalar_select %p160, %s18, 1
      %p162 = scmp.lt.s32.totalorder %s159, 19
      %s163 = scalar_select %p162, %s159, 19
      %s164 = smul.addr %s163, 8
      %s165 = smul.addr %s161, 160
      %s166 = sadd.s32 %s164, %s165
      %s167 = smul.addr %s166, 4
      %s168 = scalar_lea.vmem %s0, %s167
      %p169 = pneg %p57
      %p170 = pneg %p54
      %p171 = scmp.lt.s32.totalorder %s20, 2
      %s172 = scalar_select %p171, %s20, 2
      %s173 = smul.addr %s172, 4
      %s174 = smul.addr %s173, 4
      %s175 = scalar_lea.vmem %s1, %s174
      %p176 = pneg %p83
      %p177 = pneg %p80
      %p178 = pneg %p111
      %p179 = pneg %p108
      %p180 = scmp.lt.s32.totalorder %s18, 1
      %s181 = scalar_select %p180, %s18, 1
      %p182 = scmp.lt.s32.totalorder %s19, 17
      %s183 = scalar_select %p182, %s19, 17
      %s184 = smul.addr %s183, 6
      %s185 = smul.addr %s181, 108
      %s186 = sadd.s32 %s184, %s185
      %s187 = smul.addr %s186, 8
      %s188 = scalar_lea.vmem %s2, %s187
      %s189 = sadd.s32 %s19, %s20
      %p190 = scmp.lt.s32.totalorder %s18, 1
      %s191 = scalar_select %p190, %s18, 1
      %p192 = scmp.lt.s32.totalorder %s189, 19
      %s193 = scalar_select %p192, %s189, 19
      %s194 = smul.addr %s193, 8
      %s195 = smul.addr %s191, 160
      %s196 = sadd.s32 %s194, %s195
      %s197 = smul.addr %s196, 4
      %s198 = scalar_lea.vmem %s0, %s197
      %s199 = sadd.s32 %s19, %s20
      %p200 = scmp.lt.s32.totalorder %s20, 2
      %s201 = scalar_select %p200, %s20, 2
      %s202 = smul.addr %s201, 4
      %s203 = smul.addr %s202, 4
      %s204 = scalar_lea.vmem %s1, %s203
      %p205 = scmp.lt.s32.totalorder %s18, 1
      %s206 = scalar_select %p205, %s18, 1
      %p207 = scmp.lt.s32.totalorder %s19, 17
      %s208 = scalar_select %p207, %s19, 17
      %s209 = smul.addr %s208, 6
      %s210 = smul.addr %s206, 108
      %s211 = sadd.s32 %s209, %s210
      %s212 = smul.addr %s211, 8
      %s213 = scalar_lea.vmem %s2, %s212
      %p215 = scmp.eq.s32.totalorder %s20, 0
      // Predicated region
      $region29: #{conv_transpose3d_pallas.1} parent=27 // pred_check
        %p216 = pneg %p215
      $region30: #{conv_transpose3d_pallas.1} parent=27 // pred_check_branch
        %218 = sbr.rel (%p216) target = $region32
      $region31: #{conv_transpose3d_pallas.1} parent=27 // pred_region
        %219 = vst [vmem:[%s213] sm:$0xff] 0.0
        %220 = vst [vmem:[%s213 + $0x8] sm:$0xff] 0.0
        %vm221 = vcmask 850944
        %222 = vst.msk [vmem:[%s213 + $0x10] sm:$0xff] %vm221, 0.0
        %223 = vst [vmem:[%s213 + $0x18] sm:$0xff] 0.0
        %224 = vst [vmem:[%s213 + $0x20] sm:$0xff] 0.0
        %225 = vst.msk [vmem:[%s213 + $0x28] sm:$0xff] %vm221, 0.0
      $region32: #{conv_transpose3d_pallas.1} parent=27 // pred_fallthru
        _
      %v226 = vld [vmem:[%s198] sm:$0xff]
      %v227 = vld [vmem:[%s198 + $0x8] sm:$0xff]
      %v228 = vld [vmem:[%s198 + $0x10] sm:$0xff]
      %v229 = vld [vmem:[%s198 + $0x18] sm:$0xff]
      %v234 = vunpack.c.l.b16 %v226
      %v235 = vunpack.c.h.b16 %v226
      %v236 = vunpack.c.l.b16 %v227
      %v237 = vunpack.c.l.b16 %v228
      %v238 = vunpack.c.h.b16 %v228
      %v239 = vunpack.c.l.b16 %v229
      %v240 = vpack.c.b16 %v237, %v234
      %v241 = vpack.c.b16 %v238, %v235
      %v242 = vpack.c.b16 %v239, %v236
      %246 = vrot.lane.b32.xlu0 %v240, 127
      %v247 = vpop.permute.xlu0 %246
      %248 = vrot.lane.b32.xlu0 %v241, 127
      %v249 = vpop.permute.xlu0 %248
      %250 = vrot.lane.b32.xlu0 %v242, 127
      %v251 = vpop.permute.xlu0 %250
      %vm252 = vcmask 1039360
      %v253 = vsel %vm252, %v247, %v249
      %v254 = vsel %vm252, %v249, %v251
      %258 = vrot.lane.b32.xlu0 %v240, 126
      %v259 = vpop.permute.xlu0 %258
      %260 = vrot.lane.b32.xlu0 %v241, 126
      %v261 = vpop.permute.xlu0 %260
      %262 = vrot.lane.b32.xlu0 %v242, 126
      %v263 = vpop.permute.xlu0 %262
      %vm264 = vcmask 1031168
      %v265 = vsel %vm264, %v259, %v261
      %v266 = vsel %vm264, %v261, %v263
      %270 = vrot.lane.b32.xlu0 %v240, 108
      %v271 = vpop.permute.xlu0 %270
      %272 = vrot.lane.b32.xlu0 %v241, 108
      %v273 = vpop.permute.xlu0 %272
      %274 = vrot.lane.b32.xlu0 %v242, 108
      %v275 = vpop.permute.xlu0 %274
      %vm276 = vcmask 883712
      %v277 = vsel %vm276, %v271, %v273
      %v278 = vsel %vm276, %v273, %v275
      %282 = vrot.lane.b32.xlu0 %v240, 107
      %v283 = vpop.permute.xlu0 %282
      %284 = vrot.lane.b32.xlu0 %v241, 107
      %v285 = vpop.permute.xlu0 %284
      %286 = vrot.lane.b32.xlu0 %v242, 107
      %v287 = vpop.permute.xlu0 %286
      %vm288 = vcmask 875520
      %v289 = vsel %vm288, %v283, %v285
      %v290 = vsel %vm288, %v285, %v287
      %294 = vrot.lane.b32.xlu0 %v240, 106
      %v295 = vpop.permute.xlu0 %294
      %296 = vrot.lane.b32.xlu0 %v241, 106
      %v297 = vpop.permute.xlu0 %296
      %298 = vrot.lane.b32.xlu0 %v242, 106
      %v299 = vpop.permute.xlu0 %298
      %vm300 = vcmask 867328
      %v301 = vsel %vm300, %v295, %v297
      %v302 = vsel %vm300, %v297, %v299
      %v306 = vunpack.c.h.b16 %v227
      %v307 = vunpack.c.h.b16 %v229
      %v308 = vpack.c.b16 %v307, %v306
      %309 = vrot.lane.b32.xlu0 %v240, 88
      %v310 = vpop.permute.xlu0 %309
      %311 = vrot.lane.b32.xlu0 %v241, 88
      %v312 = vpop.permute.xlu0 %311
      %313 = vrot.lane.b32.xlu0 %v242, 88
      %v314 = vpop.permute.xlu0 %313
      %315 = vrot.lane.b32.xlu0 %v308, 88
      %v316 = vpop.permute.xlu0 %315
      %vm317 = vcmask 719872
      %v318 = vsel %vm317, %v310, %v312
      %v319 = vsel %vm317, %v312, %v314
      %v320 = vsel %vm317, %v314, %v316
      %324 = vrot.lane.b32.xlu0 %v240, 87
      %v325 = vpop.permute.xlu0 %324
      %326 = vrot.lane.b32.xlu0 %v241, 87
      %v327 = vpop.permute.xlu0 %326
      %328 = vrot.lane.b32.xlu0 %v242, 87
      %v329 = vpop.permute.xlu0 %328
      %330 = vrot.lane.b32.xlu0 %v308, 87
      %v331 = vpop.permute.xlu0 %330
      %vm332 = vcmask 711680
      %v333 = vsel %vm332, %v325, %v327
      %v334 = vsel %vm332, %v327, %v329
      %v335 = vsel %vm332, %v329, %v331
      %339 = vrot.lane.b32.xlu0 %v240, 86
      %v340 = vpop.permute.xlu0 %339
      %341 = vrot.lane.b32.xlu0 %v241, 86
      %v342 = vpop.permute.xlu0 %341
      %343 = vrot.lane.b32.xlu0 %v242, 86
      %v344 = vpop.permute.xlu0 %343
      %345 = vrot.lane.b32.xlu0 %v308, 86
      %v346 = vpop.permute.xlu0 %345
      %vm347 = vcmask 703488
      %v348 = vsel %vm347, %v340, %v342
      %v349 = vsel %vm347, %v342, %v344
      %v350 = vsel %vm347, %v344, %v346
      %v354 = vld [vmem:[%s204] sm:$0xff]
      %v355 = vld [vmem:[%s204 + $0x8] sm:$0xff]
      %v358 = vunpack.c.l.b16 %v354
      %v359 = vunpack.c.h.b16 %v354
      %v360 = vunpack.c.l.b16 %v355
      %v361 = vunpack.c.h.b16 %v355
      %v362 = vpack.c.b16 %v360, %v358
      %v363 = vpack.c.b16 %v361, %v359
      %vm365 = vcmask 130048
      %v367 = vsel %vm365, %v363, 0
      %369 = vmatprep.subr.bf16.mxu0 %v241
      %370 = vmatpush1.bf16.msra.mxu0 %v240
      %371 = vmatprep.subr.bf16.mxu0 %v254
      %372 = vmatpush1.bf16.msra.mxu0 %v253
      %373 = vmatprep.subr.bf16.mxu0 %v266
      %374 = vmatpush1.bf16.msra.mxu0 %v265
      %375 = vmatprep.subr.bf16.mxu0 %v278
      %376 = vmatpush1.bf16.msra.mxu0 %v277
      %377 = vmatprep.subr.bf16.mxu0 %v290
      %378 = vmatpush1.bf16.msra.mxu0 %v289
      %379 = vmatprep.subr.bf16.mxu0 %v302
      %380 = vmatpush1.bf16.msra.mxu0 %v301
      %381 = vmatprep.subr.bf16.mxu0 %v319
      %382 = vmatpush1.bf16.msra.mxu0 %v318
      %383 = vmatprep.subr.bf16.mxu0 %v334
      %384 = vmatpush1.bf16.msra.mxu0 %v333
      %385 = vmatprep.subr.bf16.mxu0 %v349
      %386 = vmatpush1.bf16.msra.mxu0 %v348
      %387 = vmatprep.subr.bf16.mxu0 0
      %388 = vmatpush1.bf16.msra.mxu0 0
      %389 = vmatprep.subr.bf16.mxu0 0
      %390 = vmatpush1.bf16.msra.mxu0 0
      %391 = vmatprep.subr.bf16.mxu0 0
      %392 = vmatpush1.bf16.msra.mxu0 0
      %393 = vmatprep.subr.bf16.mxu0 0
      %394 = vmatpush1.bf16.msra.mxu0 0
      %395 = vmatprep.subr.bf16.mxu0 0
      %396 = vmatpush1.bf16.msra.mxu0 0
      %397 = vmatprep.subr.bf16.mxu0 0
      %398 = vmatpush1.bf16.msra.mxu0 0
      %399 = vmatprep.subr.bf16.mxu0 0
      %400 = vmatpush1.bf16.msra.mxu0 0
      %401 = vmatprep.mubr.bf16.mxu0 %v367
      %402 = vmatmul.mubr.bf16.gmra.mrb[0].mxu0 %v362
      %v403 = vpop.f32.mrb[0].mxu0
      %v404 = vadd.f32 0.0, %v403
      %v405 = vpop.f32.mrb[0].mxu0
      %v406 = vadd.f32 0.0, %v405
      %v407 = vpop.f32.mrb[0].mxu0
      %v408 = vadd.f32 0.0, %v407
      %v409 = vpop.f32.mrb[0].mxu0
      %v410 = vadd.f32 0.0, %v409
      %411 = vdwg.mxu0
      %412 = vmatprep.subr.bf16.mxu0 0
      %413 = vmatpush1.bf16.msra.mxu0 %v242
      %414 = vmatprep.subr.bf16.mxu0 0
      %415 = vmatpush1.bf16.msra.mxu0 %v251
      %416 = vmatprep.subr.bf16.mxu0 0
      %417 = vmatpush1.bf16.msra.mxu0 %v263
      %418 = vmatprep.subr.bf16.mxu0 0
      %419 = vmatpush1.bf16.msra.mxu0 %v275
      %420 = vmatprep.subr.bf16.mxu0 0
      %421 = vmatpush1.bf16.msra.mxu0 %v287
      %422 = vmatprep.subr.bf16.mxu0 0
      %423 = vmatpush1.bf16.msra.mxu0 %v299
      %424 = vmatprep.subr.bf16.mxu0 0
      %425 = vmatpush1.bf16.msra.mxu0 %v320
      %426 = vmatprep.subr.bf16.mxu0 0
      %427 = vmatpush1.bf16.msra.mxu0 %v335
      %428 = vmatprep.subr.bf16.mxu0 0
      %429 = vmatpush1.bf16.msra.mxu0 %v350
      %430 = vmatprep.subr.bf16.mxu0 0
      %431 = vmatpush1.bf16.msra.mxu0 0
      %432 = vmatprep.subr.bf16.mxu0 0
      %433 = vmatpush1.bf16.msra.mxu0 0
      %434 = vmatprep.subr.bf16.mxu0 0
      %435 = vmatpush1.bf16.msra.mxu0 0
      %436 = vmatprep.subr.bf16.mxu0 0
      %437 = vmatpush1.bf16.msra.mxu0 0
      %438 = vmatprep.subr.bf16.mxu0 0
      %439 = vmatpush1.bf16.msra.mxu0 0
      %440 = vmatprep.subr.bf16.mxu0 0
      %441 = vmatpush1.bf16.msra.mxu0 0
      %442 = vmatprep.subr.bf16.mxu0 0
      %443 = vmatpush1.bf16.msra.mxu0 0
      %444 = vmatprep.mubr.bf16.mxu0 %v367
      %445 = vmatmul.mubr.bf16.gmra.mrb[0].mxu0 %v362
      %v446 = vpop.f32.mrb[0].mxu0
      %v447 = vadd.f32 0.0, %v446
      %v448 = vpop.f32.mrb[0].mxu0
      %v449 = vpop.f32.mrb[0].mxu0
      %v450 = vadd.f32 0.0, %v449
      %v451 = vpop.f32.mrb[0].mxu0
      %452 = vdwg.mxu0
      %v453 = vld [vmem:[%s213] sm:$0xff]
      %v454 = vld [vmem:[%s213 + $0x8] sm:$0xff]
      %v455 = vld [vmem:[%s213 + $0x10] sm:$0xff]
      %v456 = vld [vmem:[%s213 + $0x18] sm:$0xff]
      %v457 = vld [vmem:[%s213 + $0x20] sm:$0xff]
      %v458 = vld [vmem:[%s213 + $0x28] sm:$0xff]
      %v459 = vadd.f32 %v453, %v404
      %v460 = vadd.f32 %v454, %v406
      %v461 = vadd.f32 %v455, %v447
      %v462 = vadd.f32 %v456, %v408
      %v463 = vadd.f32 %v457, %v410
      %v464 = vadd.f32 %v458, %v450
      %465 = vst [vmem:[%s213] sm:$0xff] %v459
      %466 = vst [vmem:[%s213 + $0x8] sm:$0xff] %v460
      %vm467 = vcmask 850944
      %468 = vst.msk [vmem:[%s213 + $0x10] sm:$0xff] %vm467, %v461
      %469 = vst [vmem:[%s213 + $0x18] sm:$0xff] %v462
      %470 = vst [vmem:[%s213 + $0x20] sm:$0xff] %v463
      %471 = vst.msk [vmem:[%s213 + $0x28] sm:$0xff] %vm467, %v464
      %p472 = scmp.lt.s32.totalorder %s18, 1
      %s473 = scalar_select %p472, %s18, 1
      %p474 = scmp.lt.s32.totalorder %s19, 17
      %s475 = scalar_select %p474, %s19, 17
      %s476 = smul.addr %s475, 6
      %s477 = smul.addr %s473, 108
      %s478 = sadd.s32 %s476, %s477
      %s479 = smul.addr %s478, 8
      %s480 = scalar_lea.vmem %s2, %s479
      // Predicated region
      $region33: #{conv_transpose3d_pallas.1} parent=27 // pred_check
        %p481 = pneg %p108
      $region34: #{conv_transpose3d_pallas.1} parent=27 // pred_check_branch
        %483 = sbr.rel (%p481) target = $region36
      $region35: #{conv_transpose3d_pallas.1} parent=27 // pred_region
        _
      $region36: #{conv_transpose3d_pallas.1} parent=27 // pred_fallthru
        _
    $region28: #{conv_transpose3d_pallas.1} parent=5 // pred_fallthru
      _
    %p484 = scmp.le.s32.totalorder 2, %s8
    // Predicated region
    $region37: #{conv_transpose3d_pallas.1} parent=5 // pred_check
      %p485 = pneg %p484
    $region38: #{conv_transpose3d_pallas.1} parent=5 // pred_check_branch
      %487 = sbr.rel (%p485) target = $region40
    $region39: #{conv_transpose3d_pallas.1} parent=5 // pred_region
      %s488 = ssub.s32 %s8, 2
      // Predicated region
      $region41: #{conv_transpose3d_pallas.1} parent=39 // pred_check
        %p489 = pneg %p114
      $region42: #{conv_transpose3d_pallas.1} parent=39 // pred_check_branch
        %491 = sbr.rel (%p489) target = $region44
      $region43: #{conv_transpose3d_pallas.1} parent=39 // pred_region
        %p492 = scmp.lt.s32.totalorder %s21, 1
        %s493 = scalar_select %p492, %s21, 1
        %p494 = scmp.lt.s32.totalorder %s22, 17
        %s495 = scalar_select %p494, %s22, 17
        %s496 = smul.addr %s495, 6
        %s497 = smul.addr %s493, 108
        %s498 = sadd.s32 %s496, %s497
        %s499 = smul.addr %s498, 8
        %s500 = scalar_lea.vmem %s2, %s499
      $region44: #{conv_transpose3d_pallas.1} parent=39 // pred_fallthru
        _
    $region40: #{conv_transpose3d_pallas.1} parent=5 // pred_fallthru
      _
  $region6: #{conv_transpose3d_pallas.1} parent=0 // loop_footer
    %s12 = sadd.s32 1, %s8
  $region7: #{conv_transpose3d_pallas.1} parent=0 // loop_footer_branch
    %7 = sbr.rel target = $region3
  $region8: #{conv_transpose3d_pallas.1} parent=0 // loop_exit
    _

</llo_original>
